<compile_context>
chip_gen: v5e
topology: v5e:2x2
jax: 0.10.0
libtpu: 0.0.40
codegen_flags: <defaults>
</compile_context>

<pallas_src>
import functools

import jax
import jax.numpy as jnp
from jax.experimental import pallas as pl
from jax.experimental.pallas import tpu as pltpu


def _round_up(x, m):
    return ((x + m - 1) // m) * m


def _pad2d(a, rows, cols, dtype):
    """Zero-pad a 2-D array to (rows, cols) in `dtype`; no-op copy avoided."""
    a = a.astype(dtype)
    if a.shape == (rows, cols):
        return a
    return jnp.zeros((rows, cols), dtype).at[: a.shape[0], : a.shape[1]].set(a)


def projection_head_kernel(x_ref, w1_ref, b1_ref, w2_ref, b2_ref, o_ref,
                           acc_ref):
    """Grid point (i, j): batch tile i, hidden slice j.

    x_ref : [tb, D_in]      (resident across j)
    w1_ref: [D_in, th]      (streamed hidden slice of W1)
    b1_ref: [1, th]         (f32)
    w2_ref: [th, D_out]     (streamed hidden slice of W2)
    b2_ref: [1, D_out]      (f32)
    o_ref : [tb, D_out]     (written only on last j)
    acc_ref: f32 [tb, D_out] VMEM accumulator
    """
    j = pl.program_id(1)

    @pl.when(j == 0)
    def _init():
        # Fold the second bias into the accumulator init.
        acc_ref[...] = jnp.broadcast_to(b2_ref[...], acc_ref.shape)

    # First linear, this hidden slice: [tb, D_in] @ [D_in, th] -> f32 on MXU.
    h = jnp.dot(x_ref[...], w1_ref[...], preferred_element_type=jnp.float32)
    h = jnp.maximum(h + b1_ref[...], 0.0)

    # Second linear, accumulated over hidden slices: [tb, th] @ [th, D_out].
    acc_ref[...] += jnp.dot(h.astype(w2_ref.dtype), w2_ref[...],
                            preferred_element_type=jnp.float32)

    @pl.when(j == pl.num_programs(1) - 1)
    def _finalize():
        o_ref[...] = acc_ref[...].astype(o_ref.dtype)


@functools.partial(jax.jit,
                   static_argnames=("block_b", "block_h", "compute_dtype"))
def projection_head(x, w1, b1, w2, b2, *, block_b=256, block_h=512,
                    compute_dtype=None):
    out_dtype = x.dtype
    B, D_in = x.shape
    D_hid = w1.shape[1]
    D_out = w2.shape[1]

    cdt = jnp.dtype(compute_dtype) if compute_dtype is not None else jnp.dtype(x.dtype)
    itm = cdt.itemsize
    # Sublane alignment for the batch tile: 8 for f32, 16 for bf16, 32 for fp8.
    row_align = max(8, 32 // itm)

    # Lane-dense padding: every minor dim a multiple of 128.
    D_in_p = _round_up(D_in, 128)
    D_hid_p = _round_up(D_hid, 128)
    D_out_p = _round_up(D_out, 128)

    # Batch tile (multiple of row_align) and hidden tile (multiple of 128).
    tb = _round_up(min(block_b, _round_up(B, row_align)), row_align)
    th = _round_up(min(block_h, D_hid_p), 128)
    D_hid_p = _round_up(D_hid_p, th)          # no partial reduction tiles
    B_p = _round_up(B, tb)                    # no partial batch tiles

    # Zero-pad once at the boundary (zeros contribute nothing: ReLU(0+0)=0 and
    # padded hidden columns of W2 multiply against zero activations).
    xp = _pad2d(x, B_p, D_in_p, cdt)
    w1p = _pad2d(w1, D_in_p, D_hid_p, cdt)
    w2p = _pad2d(w2, D_hid_p, D_out_p, cdt)
    b1p = _pad2d(b1.reshape(1, -1), 1, D_hid_p, jnp.float32)
    b2p = _pad2d(b2.reshape(1, -1), 1, D_out_p, jnp.float32)

    grid = (B_p // tb, D_hid_p // th)

    # VMEM budget: double-buffered input/output tiles + f32 accumulator.
    out_itm = jnp.dtype(out_dtype).itemsize
    vmem_est = (2 * tb * D_in_p * itm        # x tile
                + 2 * D_in_p * th * itm      # W1 slice
                + 2 * th * 4                 # b1 slice
                + 2 * th * D_out_p * itm     # W2 slice
                + 2 * D_out_p * 4            # b2
                + 2 * tb * D_out_p * out_itm # out tile
                + tb * D_out_p * 4)          # acc scratch
    vmem_limit = min(max(int(vmem_est) + (4 << 20), 32 << 20), 100 << 20)

    out_padded = pl.pallas_call(
        projection_head_kernel,
        out_shape=jax.ShapeDtypeStruct((B_p, D_out_p), out_dtype),
        grid_spec=pltpu.PrefetchScalarGridSpec(
            num_scalar_prefetch=0,
            grid=grid,
            in_specs=[
                pl.BlockSpec((tb, D_in_p), lambda i, j: (i, 0)),    # x (resident over j)
                pl.BlockSpec((D_in_p, th), lambda i, j: (0, j)),    # W1 hidden slice
                pl.BlockSpec((1, th), lambda i, j: (0, j)),         # b1 slice
                pl.BlockSpec((th, D_out_p), lambda i, j: (j, 0)),   # W2 hidden slice
                pl.BlockSpec((1, D_out_p), lambda i, j: (0, 0)),    # b2
            ],
            out_specs=pl.BlockSpec((tb, D_out_p), lambda i, j: (i, 0)),
            scratch_shapes=[pltpu.VMEM((tb, D_out_p), jnp.float32)],
        ),
        compiler_params=pltpu.CompilerParams(
            dimension_semantics=("parallel", "arbitrary"),
            vmem_limit_bytes=vmem_limit,
        ),
    )(xp, w1p, b1p, w2p, b2p)

    return out_padded[:B, :D_out]


def init_linear_params(key, fan_in, fan_out, dtype=jnp.float32):
    """Mimics torch.nn.Linear init (uniform +/- 1/sqrt(fan_in)).

    Weight is returned already transposed to [fan_in, fan_out]."""
    kw, kb = jax.random.split(key)
    bound = 1.0 / jnp.sqrt(fan_in)
    w = jax.random.uniform(kw, (fan_in, fan_out), dtype, -bound, bound)
    b = jax.random.uniform(kb, (1, fan_out), dtype, -bound, bound)
    return w, b


if __name__ == "__main__":
    # Small shapes consistent with ProjectionHead(input_dim, hidden_dim, output_dim)
    batch, input_dim, hidden_dim, output_dim = 8, 32, 64, 16

    key = jax.random.PRNGKey(0)
    kx, k1, k2 = jax.random.split(key, 3)

    x = jax.random.normal(kx, (batch, input_dim), jnp.float32)
    w1, b1 = init_linear_params(k1, input_dim, hidden_dim)
    w2, b2 = init_linear_params(k2, hidden_dim, output_dim)

    # Pure-JAX reference
    ref = jnp.maximum(x @ w1 + b1, 0.0) @ w2 + b2

    # f32 compute path (exact check).
    out = projection_head(x, w1, b1, w2, b2)
    out = jax.block_until_ready(out)
    assert out.shape == (batch, output_dim)
    assert jnp.allclose(out, ref, atol=1e-5, rtol=1e-5), "f32 mismatch vs reference"

    # bf16 compute path (feeds the v6e/v7x bf16 MXU; f32 accumulation inside).
    out_bf16 = projection_head(x, w1, b1, w2, b2, compute_dtype=jnp.bfloat16)
    out_bf16 = jax.block_until_ready(out_bf16)
    assert out_bf16.shape == (batch, output_dim)
    assert jnp.allclose(out_bf16, ref, atol=5e-2, rtol=5e-2), "bf16 mismatch vs reference"

    print("KERNEL_OK")
</pallas_src>

<mosaic_0001>
module attributes {stable_mosaic.version = 11 : i64} {
  func.func @projection_head_kernel(%arg0: i32, %arg1: i32, %arg2: memref<8x128xf32, #tpu.memory_space<vmem>>, %arg3: memref<128x128xf32, #tpu.memory_space<vmem>>, %arg4: memref<1x128xf32, #tpu.memory_space<vmem>>, %arg5: memref<128x128xf32, #tpu.memory_space<vmem>>, %arg6: memref<1x128xf32, #tpu.memory_space<vmem>>, %arg7: memref<8x128xf32, #tpu.memory_space<vmem>>, %arg8: memref<8x128xf32, #tpu.memory_space<vmem>>) attributes {dimension_semantics = [#tpu.dimension_semantics<parallel>, #tpu.dimension_semantics<arbitrary>], iteration_bounds = array<i64: 1, 1>, scalar_prefetch = 0 : i64, scratch_operands = 1 : i64, tpu.core_type = #tpu.core_type<tc>, window_params = [{transform_indices = @transform_0, window_bounds = array<i64: 8, 128>}, {transform_indices = @transform_1, window_bounds = array<i64: 128, 128>}, {transform_indices = @transform_2, window_bounds = array<i64: 1, 128>}, {transform_indices = @transform_3, window_bounds = array<i64: 128, 128>}, {pipeline_mode = #tpu.pipeline_mode<synchronous>, transform_indices = @transform_4, window_bounds = array<i64: 1, 128>}, {transform_indices = @transform_5, window_bounds = array<i64: 8, 128>}]} {
    %c0_i32 = arith.constant 0 : i32
    %0 = arith.cmpi eq, %arg1, %c0_i32 : i32
    %1 = arith.extui %0 : i1 to i32
    %c0_i32_0 = arith.constant 0 : i32
    %2 = arith.cmpi ne, %1, %c0_i32_0 : i32
    scf.if %2 {
      %c0_16 = arith.constant 0 : index
      %c0_17 = arith.constant 0 : index
      %19 = vector.load %arg6[%c0_16, %c0_17] : memref<1x128xf32, #tpu.memory_space<vmem>>, vector<1x128xf32>
      %20 = vector.shape_cast %19 : vector<1x128xf32> to vector<1x128xf32>
      %21 = vector.broadcast %20 : vector<1x128xf32> to vector<8x128xf32>
      %c0_18 = arith.constant 0 : index
      %c0_19 = arith.constant 0 : index
      %22 = vector.load %arg8[%c0_18, %c0_19] : memref<8x128xf32, #tpu.memory_space<vmem>>, vector<8x128xf32>
      tpu.vector_store %arg8[%c0_18, %c0_19], %21 {strides = array<i32>} : memref<8x128xf32, #tpu.memory_space<vmem>>, vector<8x128xf32>,
    } else {
    }
    %c0 = arith.constant 0 : index
    %c0_1 = arith.constant 0 : index
    %3 = vector.load %arg2[%c0, %c0_1] : memref<8x128xf32, #tpu.memory_space<vmem>>, vector<8x128xf32>
    %c0_2 = arith.constant 0 : index
    %c0_3 = arith.constant 0 : index
    %4 = vector.load %arg3[%c0_2, %c0_3] : memref<128x128xf32, #tpu.memory_space<vmem>>, vector<128x128xf32>
    %cst = arith.constant dense<0.000000e+00> : vector<8x128xf32>
    %5 = tpu.matmul %3, %4, %cst {dimension_numbers = #tpu.dot_dimension_numbers<[1], [0], [0], [1], [0, 0, 1, 1], [], []>} : vector<8x128xf32>, vector<128x128xf32>, vector<8x128xf32> -> vector<8x128xf32>
    %c0_4 = arith.constant 0 : index
    %c0_5 = arith.constant 0 : index
    %6 = vector.load %arg4[%c0_4, %c0_5] : memref<1x128xf32, #tpu.memory_space<vmem>>, vector<1x128xf32>
    %7 = vector.broadcast %6 : vector<1x128xf32> to vector<8x128xf32>
    %8 = arith.addf %5, %7 : vector<8x128xf32>
    %cst_6 = arith.constant 0.000000e+00 : f32
    %9 = vector.broadcast %cst_6 : f32 to vector<8x128xf32>
    %10 = arith.maximumf %8, %9 : vector<8x128xf32>
    %c0_7 = arith.constant 0 : index
    %c0_8 = arith.constant 0 : index
    %11 = vector.load %arg8[%c0_7, %c0_8] : memref<8x128xf32, #tpu.memory_space<vmem>>, vector<8x128xf32>
    %c0_9 = arith.constant 0 : index
    %c0_10 = arith.constant 0 : index
    %12 = vector.load %arg5[%c0_9, %c0_10] : memref<128x128xf32, #tpu.memory_space<vmem>>, vector<128x128xf32>
    %cst_11 = arith.constant dense<0.000000e+00> : vector<8x128xf32>
    %13 = tpu.matmul %10, %12, %cst_11 {dimension_numbers = #tpu.dot_dimension_numbers<[1], [0], [0], [1], [0, 0, 1, 1], [], []>} : vector<8x128xf32>, vector<128x128xf32>, vector<8x128xf32> -> vector<8x128xf32>
    %14 = arith.addf %11, %13 : vector<8x128xf32>
    %c0_12 = arith.constant 0 : index
    %c0_13 = arith.constant 0 : index
    %15 = vector.load %arg8[%c0_12, %c0_13] : memref<8x128xf32, #tpu.memory_space<vmem>>, vector<8x128xf32>
    tpu.vector_store %arg8[%c0_12, %c0_13], %14 {strides = array<i32>} : memref<8x128xf32, #tpu.memory_space<vmem>>, vector<8x128xf32>,
    %c0_i32_14 = arith.constant 0 : i32
    %16 = arith.cmpi eq, %arg1, %c0_i32_14 : i32
    %17 = arith.extui %16 : i1 to i32
    %c0_i32_15 = arith.constant 0 : i32
    %18 = arith.cmpi ne, %17, %c0_i32_15 : i32
    scf.if %18 {
      %c0_16 = arith.constant 0 : index
      %c0_17 = arith.constant 0 : index
      %19 = vector.load %arg8[%c0_16, %c0_17] : memref<8x128xf32, #tpu.memory_space<vmem>>, vector<8x128xf32>
      %c0_18 = arith.constant 0 : index
      %c0_19 = arith.constant 0 : index
      %20 = vector.load %arg7[%c0_18, %c0_19] : memref<8x128xf32, #tpu.memory_space<vmem>>, vector<8x128xf32>
      tpu.vector_store %arg7[%c0_18, %c0_19], %19 {strides = array<i32>} : memref<8x128xf32, #tpu.memory_space<vmem>>, vector<8x128xf32>,
    } else {
    }
    return
  }
  func.func @transform_0(%arg0: i32, %arg1: i32) -> (i32, i32) {
    %c0_i32 = arith.constant 0 : i32
    %c0_i32_0 = arith.constant 0 : i32
    return %arg0, %c0_i32 : i32, i32
  }
  func.func @transform_1(%arg0: i32, %arg1: i32) -> (i32, i32) {
    %c0_i32 = arith.constant 0 : i32
    %c0_i32_0 = arith.constant 0 : i32
    return %c0_i32, %arg1 : i32, i32
  }
  func.func @transform_2(%arg0: i32, %arg1: i32) -> (i32, i32) {
    %c0_i32 = arith.constant 0 : i32
    %c0_i32_0 = arith.constant 0 : i32
    return %c0_i32, %arg1 : i32, i32
  }
  func.func @transform_3(%arg0: i32, %arg1: i32) -> (i32, i32) {
    %c0_i32 = arith.constant 0 : i32
    %c0_i32_0 = arith.constant 0 : i32
    return %arg1, %c0_i32 : i32, i32
  }
  func.func @transform_4(%arg0: i32, %arg1: i32) -> (i32, i32) {
    %c0_i32 = arith.constant 0 : i32
    %c0_i32_0 = arith.constant 0 : i32
    %c0_i32_1 = arith.constant 0 : i32
    return %c0_i32, %c0_i32_0 : i32, i32
  }
  func.func @transform_5(%arg0: i32, %arg1: i32) -> (i32, i32) {
    %c0_i32 = arith.constant 0 : i32
    %c0_i32_0 = arith.constant 0 : i32
    return %arg0, %c0_i32 : i32, i32
  }
}

</mosaic_0001>

<llo_original>
// kernel: projection_head.1
$region0: #{projection_head.1}
  #allocation0 [shape = 'u32[]', space=smem, size = 0x4, offset = 0x4, fixed_abs, tag = 'smem constant byte address 0x4 - core index']
  #allocation1 [shape = 'u32[72,128]{1,0:T(1,128)}', space=vmem, size = 0x9000, scoped, tag = 'internal scratch']
  #allocation2 [shape = 'f32[8,128]{1,0:T(8,128)}', space=vmem, size = 0x1000, scoped, tag = 'scratch operand']
  %s0 = inlined_call_operand.vmem [shape: f32[8,128], index: 0, kind: input, shape index: {}]
  %s1 = inlined_call_operand.vmem [shape: f32[128,128], index: 1, kind: input, shape index: {}]
  %s2 = inlined_call_operand.vmem [shape: f32[1,128], index: 2, kind: input, shape index: {}]
  %s3 = inlined_call_operand.vmem [shape: f32[128,128], index: 3, kind: input, shape index: {}]
  %s4 = inlined_call_operand.vmem [shape: f32[1,128], index: 4, kind: input, shape index: {}]
  %s5 = inlined_call_operand.hbm [shape: f32[8,128], index: 5, kind: output, shape index: {}]
  %s6 = sld [smem:[#allocation0]]
  $region38: #{projection_head.1} parent=0
    _
  %s8 = ssub.s32 1, %s6
  %s9 = scalar_select 0, %s8, %s6
  $region1: #{projection_head.1} parent=0
    #allocation3 [shape = 'u8[4096]{0}', space=vmem, size = 0x1000, scoped, tag = 'output window, operand 0, single buffered']
    #allocation4 [shape = 's32[1]{0}', space=sflag, size = 0x4, scoped, tag = 'scoped memory for projection_head.1']
    %10 = vsyncpa [#allocation4], 0
    // Predicated region
    $region2: #{projection_head.1} parent=1 // pred_check
      _
    $region3: #{projection_head.1} parent=1 // pred_check_branch
      %12 = sbr.rel (0) target = $region5
    $region4: #{projection_head.1} parent=1 // pred_region
      _
    $region5: #{projection_head.1} parent=1 // pred_fallthru
      _
    // Predicated region
    $region6: #{projection_head.1} parent=1 // pred_check
      _
    $region7: #{projection_head.1} parent=1 // pred_check_branch
      %14 = sbr.rel (0) target = $region9
    $region8: #{projection_head.1} parent=1 // pred_region
      _
    $region9: #{projection_head.1} parent=1 // pred_fallthru
      _
    // Predicated region
    $region10: #{projection_head.1} parent=1 // pred_check
      _
    $region11: #{projection_head.1} parent=1 // pred_check_branch
      %16 = sbr.rel (0) target = $region13
    $region12: #{projection_head.1} parent=1 // pred_region
      _
    $region13: #{projection_head.1} parent=1 // pred_fallthru
      _
    // Predicated region
    $region14: #{projection_head.1} parent=1 // pred_check
      _
    $region15: #{projection_head.1} parent=1 // pred_check_branch
      %18 = sbr.rel (0) target = $region17
    $region16: #{projection_head.1} parent=1 // pred_region
      _
    $region17: #{projection_head.1} parent=1 // pred_fallthru
      _
    // Predicated region
    $region18: #{projection_head.1} parent=1 // pred_check
      _
    $region19: #{projection_head.1} parent=1 // pred_check_branch
      %20 = sbr.rel (0) target = $region21
    $region20: #{projection_head.1} parent=1 // pred_region
      _
    $region21: #{projection_head.1} parent=1 // pred_fallthru
      _
    %p21 = scmp.eq.s32.totalorder 0, 0
    // Predicated region
    $region22: #{projection_head.1} parent=1 // pred_check
      %p22 = pneg %p21
    $region23: #{projection_head.1} parent=1 // pred_check_branch
      %24 = sbr.rel (%p22) target = $region25
    $region24: #{projection_head.1} parent=1 // pred_region
      %v25 = vld [vmem:[%s4] sm:$0x1]
      %v27 = vperm.slane %v25, 0
      %29 = vst [vmem:[#allocation2] sm:$0xff] %v27
    $region25: #{projection_head.1} parent=1 // pred_fallthru
      _
    %v30 = vld [vmem:[%s0] sm:$0xff]
    %v31 = vld [vmem:[%s1] sm:$0xff]
    %v32 = vld [vmem:[%s1 + $0x8] sm:$0xff]
    %v33 = vld [vmem:[%s1 + $0x10] sm:$0xff]
    %v34 = vld [vmem:[%s1 + $0x18] sm:$0xff]
    %v35 = vld [vmem:[%s1 + $0x20] sm:$0xff]
    %v36 = vld [vmem:[%s1 + $0x28] sm:$0xff]
    %v37 = vld [vmem:[%s1 + $0x30] sm:$0xff]
    %v38 = vld [vmem:[%s1 + $0x38] sm:$0xff]
    %v39 = vld [vmem:[%s1 + $0x40] sm:$0xff]
    %v40 = vld [vmem:[%s1 + $0x48] sm:$0xff]
    %v41 = vld [vmem:[%s1 + $0x50] sm:$0xff]
    %v42 = vld [vmem:[%s1 + $0x58] sm:$0xff]
    %v43 = vld [vmem:[%s1 + $0x60] sm:$0xff]
    %v44 = vld [vmem:[%s1 + $0x68] sm:$0xff]
    %v45 = vld [vmem:[%s1 + $0x70] sm:$0xff]
    %v46 = vld [vmem:[%s1 + $0x78] sm:$0xff]
    %v47 = vld [vmem:[%s2] sm:$0x1]
    %v49 = vperm.slane %v47, 0
    %51 = vmatpush.msra.mxu0 %v46
    %52 = vmatpush.msra.mxu0 %v45
    %53 = vmatpush.msra.mxu0 %v44
    %54 = vmatpush.msra.mxu0 %v43
    %55 = vmatpush.msra.mxu0 %v42
    %56 = vmatpush.msra.mxu0 %v41
    %57 = vmatpush.msra.mxu0 %v40
    %58 = vmatpush.msra.mxu0 %v39
    %59 = vmatpush.msra.mxu0 %v38
    %60 = vmatpush.msra.mxu0 %v37
    %61 = vmatpush.msra.mxu0 %v36
    %62 = vmatpush.msra.mxu0 %v35
    %63 = vmatpush.msra.mxu0 %v34
    %64 = vmatpush.msra.mxu0 %v33
    %65 = vmatpush.msra.mxu0 %v32
    %66 = vmatpush.msra.mxu0 %v31
    %67 = vmatmul.f32.gmra.mxu0 %v30
    %v68 = vpop.f32.mrf.mxu0
    %v69 = vadd.f32 %v49, %v68
    %70 = vdwg.mxu0
    %v71 = vmax.f32 %v69, 0.0
    %v72 = vld [vmem:[#allocation2] sm:$0xff]
    %v73 = vld [vmem:[%s3] sm:$0xff]
    %v74 = vld [vmem:[%s3 + $0x8] sm:$0xff]
    %v75 = vld [vmem:[%s3 + $0x10] sm:$0xff]
    %v76 = vld [vmem:[%s3 + $0x18] sm:$0xff]
    %v77 = vld [vmem:[%s3 + $0x20] sm:$0xff]
    %v78 = vld [vmem:[%s3 + $0x28] sm:$0xff]
    %v79 = vld [vmem:[%s3 + $0x30] sm:$0xff]
    %v80 = vld [vmem:[%s3 + $0x38] sm:$0xff]
    %v81 = vld [vmem:[%s3 + $0x40] sm:$0xff]
    %v82 = vld [vmem:[%s3 + $0x48] sm:$0xff]
    %v83 = vld [vmem:[%s3 + $0x50] sm:$0xff]
    %v84 = vld [vmem:[%s3 + $0x58] sm:$0xff]
    %v85 = vld [vmem:[%s3 + $0x60] sm:$0xff]
    %v86 = vld [vmem:[%s3 + $0x68] sm:$0xff]
    %v87 = vld [vmem:[%s3 + $0x70] sm:$0xff]
    %v88 = vld [vmem:[%s3 + $0x78] sm:$0xff]
    %89 = vmatpush.msra.mxu0 %v88
    %90 = vmatpush.msra.mxu0 %v87
    %91 = vmatpush.msra.mxu0 %v86
    %92 = vmatpush.msra.mxu0 %v85
    %93 = vmatpush.msra.mxu0 %v84
    %94 = vmatpush.msra.mxu0 %v83
    %95 = vmatpush.msra.mxu0 %v82
    %96 = vmatpush.msra.mxu0 %v81
    %97 = vmatpush.msra.mxu0 %v80
    %98 = vmatpush.msra.mxu0 %v79
    %99 = vmatpush.msra.mxu0 %v78
    %100 = vmatpush.msra.mxu0 %v77
    %101 = vmatpush.msra.mxu0 %v76
    %102 = vmatpush.msra.mxu0 %v75
    %103 = vmatpush.msra.mxu0 %v74
    %104 = vmatpush.msra.mxu0 %v73
    %105 = vmatmul.f32.gmra.mxu0 %v71
    %v106 = vpop.f32.mrf.mxu0
    %v107 = vadd.f32 0.0, %v106
    %108 = vdwg.mxu0
    %v109 = vadd.f32 %v72, %v107
    %110 = vst [vmem:[#allocation2] sm:$0xff] %v109
    // Predicated region
    $region26: #{projection_head.1} parent=1 // pred_check
      %p111 = pneg %p21
    $region27: #{projection_head.1} parent=1 // pred_check_branch
      %113 = sbr.rel (%p111) target = $region29
    $region28: #{projection_head.1} parent=1 // pred_region
      %v114 = vld [vmem:[#allocation2] sm:$0xff]
      %115 = vst [vmem:[#allocation3] sm:$0xff] %v114
    $region29: #{projection_head.1} parent=1 // pred_fallthru
      _
    // Predicated region
    $region30: #{projection_head.1} parent=1 // pred_check
      _
    $region31: #{projection_head.1} parent=1 // pred_check_branch
      %117 = sbr.rel (0) target = $region33
    $region32: #{projection_head.1} parent=1 // pred_region
      %119 = vsyncadd [#allocation4], 0
      %s121 = sshll.u32 [#allocation3], 4
      %s122 = int_to_ptr.vmem [resolvable:$true] %s121
      %s123 = sshll.u32 %s5, 4
      %s124 = int_to_ptr.hbm [resolvable:$true] %s123
      %126 = dma.vmem_to_hbm [thread:$0]  %s122, 128, %s124, [#allocation4]
    $region33: #{projection_head.1} parent=1 // pred_fallthru
      _
    // Predicated region
    $region34: #{projection_head.1} parent=1 // pred_check
      _
    $region35: #{projection_head.1} parent=1 // pred_check_branch
      %128 = sbr.rel (0) target = $region37
    $region36: #{projection_head.1} parent=1 // pred_region
      %130 = dma.done [#allocation4], 128
    $region37: #{projection_head.1} parent=1 // pred_fallthru
      _
    %131 = vsyncpa [#allocation4], 1

</llo_original>
